<compile_context>
chip_gen: v6e
topology: v6e:2x2x1
jax: 0.10.0
libtpu: 0.0.40
codegen_flags: <defaults>
</compile_context>

<pallas_src>
import functools

import jax
import jax.numpy as jnp
from jax import lax
from jax.experimental import pallas as pl
from jax.experimental.pallas import tpu as pltpu


def _grad3d_kernel(x_ref, mh_ref, mw_ref, out_ref, carry_ref=None, *,
                   penalty_l2: bool, w: int):
    """One grid step over a (tbc, td, HW) block of y_pred.

    Grid is (n_bc, n_d): axis 0 ("parallel") walks groups of fused B*C
    volumes, axis 1 ("arbitrary") walks D-chunks of those volumes.  Partial
    |diff| sums accumulate into the (1, 8, 128) output tile that stays
    resident in VMEM across the D axis:
        sublane 0 -> H-axis diffs (PyTorch `dx`)
        sublane 1 -> D-axis diffs (PyTorch `dy`)
        sublane 2 -> W-axis diffs (PyTorch `dz`)
    """
    k = pl.program_id(1)
    tbc, td, hw = x_ref.shape
    zero = jnp.float32(0.0)

    @pl.when(k == 0)
    def _init():
        out_ref[...] = jnp.zeros_like(out_ref)
        if carry_ref is not None:
            # First cross-chunk D pair becomes a zero diff (no previous chunk).
            carry_ref[...] = x_ref[:, 0:1, :].astype(jnp.float32)

    def pen(d):
        # l2: abs(d)^2 == d^2, so skip the redundant abs.
        return d * d if penalty_l2 else jnp.abs(d)

    m_h = mh_ref[...]            # (1, hw): 1.0 iff lane i has a valid H pair
    m_w = mw_ref[...]            # (1, hw): 1.0 iff lane i has a valid W pair

    # Use aligned XLU rotations when the minor dims are vreg-aligned;
    # otherwise fall back to the (correct, slower) slice path.
    lane_roll_ok = (hw % 128 == 0)
    d_roll_ok = (td > 1) and (td % 8 == 0)
    if d_roll_ok:
        dmask = lax.broadcasted_iota(jnp.int32, (td, 1), 0) < td - 1

    def body(t, acc):
        s_dx, s_dy, s_dz = acc
        xt = x_ref[t].astype(jnp.float32)                      # (td, hw)

        # H-axis diff: neighbour is `w` lanes away in the flattened H*W axis.
        if hw > w:                                             # H > 1
            if lane_roll_ok:
                dh = pen(pltpu.roll(xt, hw - w, axis=1) - xt)
                s_dx = s_dx + jnp.sum(
                    jnp.sum(dh, axis=0, keepdims=True) * m_h)
            else:
                s_dx = s_dx + jnp.sum(pen(xt[:, w:] - xt[:, :-w]))

        # W-axis diff: neighbour is 1 lane away; pairs crossing an H-row
        # boundary (and the wrap-around pair) are masked out.
        if w > 1:
            if lane_roll_ok:
                dw = pen(pltpu.roll(xt, hw - 1, axis=1) - xt)
                s_dz = s_dz + jnp.sum(
                    jnp.sum(dw, axis=0, keepdims=True) * m_w)
            else:
                dw = pen(xt[:, 1:] - xt[:, :-1])
                s_dz = s_dz + jnp.sum(dw * m_w[:, :hw - 1])

        # D-axis diff, in-chunk pairs: sublane rotation + per-sublane mask.
        if td > 1:
            if d_roll_ok:
                dd = pen(pltpu.roll(xt, td - 1, axis=0) - xt)
                red = jnp.sum(dd, axis=1, keepdims=True)       # (td, 1)
                s_dy = s_dy + jnp.sum(jnp.where(dmask, red, zero))
            else:
                s_dy = s_dy + jnp.sum(pen(xt[1:, :] - xt[:-1, :]))

        # D-axis diff across the chunk boundary: first plane of this chunk vs
        # carried last plane of the previous chunk (zero at k == 0).
        if carry_ref is not None:
            s_dy = s_dy + jnp.sum(pen(xt[0:1, :] - carry_ref[t]))
            carry_ref[t] = xt[td - 1:td, :]

        return s_dx, s_dy, s_dz

    s_dx, s_dy, s_dz = lax.fori_loop(0, tbc, body, (zero, zero, zero))

    # Accumulate the three scalars into a lane-dense (1, 8, 128) output tile.
    sub = lax.broadcasted_iota(jnp.int32, (1, 8, 128), 1)
    tile = jnp.where(sub == 0, s_dx,
                     jnp.where(sub == 1, s_dy,
                               jnp.where(sub == 2, s_dz, zero)))
    out_ref[...] = out_ref[...] + tile


def grad3d(y_pred, y_true=None, *, penalty='l1', loss_mult=None,
           block_target_elems=512 * 1024,
           vmem_limit_bytes=32 * 1024 * 1024):
    """Pallas TPU implementation of Grad3d.forward.

    `y_true` is unused (as in the PyTorch reference).  If any of D, H, W is 1
    the corresponding mean is over an empty set and the result is NaN,
    matching torch.mean of an empty tensor.
    """
    del y_true
    B, C, D, H, W = y_pred.shape
    N = B * C
    HW = H * W
    x = y_pred.reshape(N, D, HW)          # lane-dense layout (H*W is minor)

    # Sublane tile of this dtype (8 rows for 4-byte, 16 for 2-byte, ...).
    sub_pack = max(1, (8 * 4) // y_pred.dtype.itemsize)

    # ---- D-chunk size: full D when one (D, HW) slab fits the block budget,
    # otherwise the largest sublane-aligned divisor of D that fits.
    td = D
    if D * HW > block_target_elems and D > sub_pack:
        max_td = max(sub_pack,
                     (block_target_elems // HW) // sub_pack * sub_pack)
        for cand in range(min(D, max_td) // sub_pack, 0, -1):
            c = cand * sub_pack
            if D % c == 0:
                td = c
                break
        # TODO(synk): if D has no sublane-aligned divisor, td stays D (full
        # slab); pad D + mask the boundary pair to cover that corner as well.
    n_d = D // td

    # ---- Volumes fused per block (leading block dim, no alignment rule).
    max_tbc = max(1, block_target_elems // (td * HW))
    if N >= 2:
        max_tbc = min(max_tbc, (N + 1) // 2)   # keep >= 2 parallel blocks (v7x)
    max_tbc = max(1, min(max_tbc, N))

    # Prefer an exact divisor of N (no padding copy); zero-pad awkward N
    # instead of collapsing to tbc = 1 (zero volumes contribute 0 everywhere).
    tbc = 1
    for cand in range(max_tbc, 0, -1):
        if N % cand == 0:
            tbc = cand
            break
    n_vol = N
    if tbc * 2 < max_tbc:
        tbc = max_tbc
        n_vol = -(-N // tbc) * tbc
        x = jnp.pad(x, ((0, n_vol - N), (0, 0), (0, 0)))
    n_bc = n_vol // tbc

    # Precomputed lane-validity masks, applied to reduced (1, HW) vectors.
    idx = jnp.arange(HW, dtype=jnp.int32)
    m_h = (idx < (H - 1) * W).astype(jnp.float32).reshape(1, HW)
    m_w = ((idx % W) != (W - 1)).astype(jnp.float32).reshape(1, HW)

    kernel = functools.partial(
        _grad3d_kernel, penalty_l2=(penalty == 'l2'), w=W)

    scratch_shapes = []
    if n_d > 1:
        scratch_shapes = [pltpu.VMEM((tbc, 1, HW), jnp.float32)]

    flops = 9 * x.size
    bytes_accessed = (x.size * x.dtype.itemsize + 2 * HW * 4
                      + n_bc * 8 * 128 * 4)

    partials = pl.pallas_call(
        kernel,
        out_shape=jax.ShapeDtypeStruct((n_bc, 8, 128), jnp.float32),
        grid=(n_bc, n_d),
        in_specs=[
            pl.BlockSpec((tbc, td, HW), lambda i, k: (i, k, 0)),
            pl.BlockSpec((1, HW), lambda i, k: (0, 0)),
            pl.BlockSpec((1, HW), lambda i, k: (0, 0)),
        ],
        out_specs=pl.BlockSpec((1, 8, 128), lambda i, k: (i, 0, 0)),
        scratch_shapes=scratch_shapes,
        compiler_params=pltpu.CompilerParams(
            dimension_semantics=("parallel", "arbitrary"),
            vmem_limit_bytes=vmem_limit_bytes),
        cost_estimate=pl.CostEstimate(
            flops=int(flops), transcendentals=0,
            bytes_accessed=int(bytes_accessed)),
    )(x, m_h, m_w)

    # Tiny final reduction over independent per-block partials (in XLA).
    s_dx = jnp.sum(partials[:, 0, 0])
    s_dy = jnp.sum(partials[:, 1, 0])
    s_dz = jnp.sum(partials[:, 2, 0])

    n_dx = N * D * (H - 1) * W    # elements of the H-axis diff
    n_dy = N * (D - 1) * H * W    # elements of the D-axis diff
    n_dz = N * D * H * (W - 1)    # elements of the W-axis diff

    d = s_dx / n_dx + s_dy / n_dy + s_dz / n_dz
    grad = d / 3.0
    if loss_mult is not None:
        grad = grad * loss_mult
    return grad


def _grad3d_reference(y_pred, penalty='l1', loss_mult=None):
    dy = jnp.abs(y_pred[:, :, 1:, :, :] - y_pred[:, :, :-1, :, :])
    dx = jnp.abs(y_pred[:, :, :, 1:, :] - y_pred[:, :, :, :-1, :])
    dz = jnp.abs(y_pred[:, :, :, :, 1:] - y_pred[:, :, :, :, :-1])
    if penalty == 'l2':
        dy, dx, dz = dy * dy, dx * dx, dz * dz
    d = jnp.mean(dx) + jnp.mean(dy) + jnp.mean(dz)
    grad = d / 3.0
    if loss_mult is not None:
        grad = grad * loss_mult
    return grad


if __name__ == "__main__":
    key = jax.random.PRNGKey(0)
    k1, k2 = jax.random.split(key)

    # [B, C, D, H, W]
    y_pred = jax.random.normal(k1, (2, 4, 8, 16, 16), dtype=jnp.float32)
    y_true = jax.random.normal(k2, (2, 4, 8, 16, 16), dtype=jnp.float32)

    out_l1 = jax.block_until_ready(grad3d(y_pred, y_true, penalty='l1'))
    out_l2 = jax.block_until_ready(
        grad3d(y_pred, y_true, penalty='l2', loss_mult=0.5))
    # Force a 4-step parallel grid along the fused B*C axis.
    out_l1_multi = jax.block_until_ready(
        grad3d(y_pred, y_true, penalty='l1', block_target_elems=4096))

    ref_l1 = _grad3d_reference(y_pred, penalty='l1')
    ref_l2 = _grad3d_reference(y_pred, penalty='l2', loss_mult=0.5)

    assert jnp.allclose(out_l1, ref_l1, rtol=1e-5, atol=1e-5), (out_l1, ref_l1)
    assert jnp.allclose(out_l2, ref_l2, rtol=1e-5, atol=1e-5), (out_l2, ref_l2)
    assert jnp.allclose(out_l1_multi, ref_l1, rtol=1e-5, atol=1e-5), (
        out_l1_multi, ref_l1)

    # Exercise the D-chunked path (carried boundary plane, "arbitrary" axis).
    y_deep = jax.random.normal(k2, (2, 2, 32, 8, 16), dtype=jnp.float32)
    out_deep = jax.block_until_ready(
        grad3d(y_deep, penalty='l2', block_target_elems=1024))
    ref_deep = _grad3d_reference(y_deep, penalty='l2')
    assert jnp.allclose(out_deep, ref_deep, rtol=1e-5, atol=1e-5), (
        out_deep, ref_deep)

    print("KERNEL_OK")
</pallas_src>

<mosaic_0001>
module attributes {stable_mosaic.version = 11 : i64} {
  func.func @_grad3d_kernel(%arg0: i32, %arg1: i32, %arg2: memref<4x8x256xf32, #tpu.memory_space<vmem>>, %arg3: memref<1x256xf32, #tpu.memory_space<vmem>>, %arg4: memref<1x256xf32, #tpu.memory_space<vmem>>, %arg5: memref<1x8x128xf32, #tpu.memory_space<vmem>>) attributes {dimension_semantics = [#tpu.dimension_semantics<parallel>, #tpu.dimension_semantics<arbitrary>], iteration_bounds = array<i64: 2, 1>, scalar_prefetch = 0 : i64, scratch_operands = 0 : i64, tpu.core_type = #tpu.core_type<tc>, window_params = [{transform_indices = @transform_0, window_bounds = array<i64: 4, 8, 256>}, {pipeline_mode = #tpu.pipeline_mode<synchronous>, transform_indices = @transform_1, window_bounds = array<i64: 1, 256>}, {pipeline_mode = #tpu.pipeline_mode<synchronous>, transform_indices = @transform_2, window_bounds = array<i64: 1, 256>}, {transform_indices = @transform_3, window_bounds = array<i64: 1, 8, 128>}]} {
    %c0_i32 = arith.constant 0 : i32
    %0 = arith.cmpi eq, %arg1, %c0_i32 : i32
    %1 = arith.extui %0 : i1 to i32
    %c0_i32_0 = arith.constant 0 : i32
    %2 = arith.cmpi ne, %1, %c0_i32_0 : i32
    scf.if %2 {
      %cst_18 = arith.constant 0.000000e+00 : f32
      %27 = vector.broadcast %cst_18 : f32 to vector<1x8x128xf32>
      %c0_19 = arith.constant 0 : index
      %c0_20 = arith.constant 0 : index
      %c0_21 = arith.constant 0 : index
      %28 = vector.load %arg5[%c0_19, %c0_20, %c0_21] : memref<1x8x128xf32, #tpu.memory_space<vmem>>, vector<1x8x128xf32>
      tpu.vector_store %arg5[%c0_19, %c0_20, %c0_21], %27 {strides = array<i32>} : memref<1x8x128xf32, #tpu.memory_space<vmem>>, vector<1x8x128xf32>,
    } else {
    }
    %c0 = arith.constant 0 : index
    %c0_1 = arith.constant 0 : index
    %3 = vector.load %arg3[%c0, %c0_1] : memref<1x256xf32, #tpu.memory_space<vmem>>, vector<1x256xf32>
    %c0_2 = arith.constant 0 : index
    %c0_3 = arith.constant 0 : index
    %4 = vector.load %arg4[%c0_2, %c0_3] : memref<1x256xf32, #tpu.memory_space<vmem>>, vector<1x256xf32>
    %5 = tpu.iota {dimensions = array<i32: 0>} : vector<8x1xi32>
    %c7_i32 = arith.constant 7 : i32
    %6 = vector.broadcast %c7_i32 : i32 to vector<8x1xi32>
    %7 = arith.cmpi slt, %5, %6 : vector<8x1xi32>
    %cst = arith.constant 0.000000e+00 : f32
    %cst_4 = arith.constant 0.000000e+00 : f32
    %cst_5 = arith.constant 0.000000e+00 : f32
    %cst_6 = arith.constant 0.000000e+00 : f32
    %c0_i32_7 = arith.constant 0 : i32
    %c4_i32 = arith.constant 4 : i32
    %8 = arith.addi %c0_i32_7, %c4_i32 : i32
    %c1_i32 = arith.constant 1 : i32
    %9:3 = scf.for %arg6 = %c0_i32_7 to %8 step %c1_i32 iter_args(%arg7 = %cst_4, %arg8 = %cst_5, %arg9 = %cst_6) -> (f32, f32, f32)  : i32 {
      %27 = arith.index_cast %arg6 : i32 to index
      %c0_18 = arith.constant 0 : index
      %c0_19 = arith.constant 0 : index
      %28 = vector.load %arg2[%27, %c0_18, %c0_19] : memref<4x8x256xf32, #tpu.memory_space<vmem>>, vector<1x8x256xf32>
      %29 = vector.shape_cast %28 : vector<1x8x256xf32> to vector<8x256xf32>
      %c240_i32 = arith.constant 240 : i32
      %30 = tpu.dynamic_rotate %29 by %c240_i32 dim 1 : vector<8x256xf32>, i32 -> vector<8x256xf32>
      %31 = arith.subf %30, %29 : vector<8x256xf32>
      %32 = math.absf %31 : vector<8x256xf32>
      %cst_20 = arith.constant dense<0.000000e+00> : vector<256xf32>
      %33 = vector.multi_reduction <add>, %32, %cst_20 [0] : vector<8x256xf32> to vector<256xf32>
      %34 = vector.shape_cast %33 : vector<256xf32> to vector<1x256xf32>
      %35 = arith.mulf %34, %3 : vector<1x256xf32>
      %36 = vector.shape_cast %35 : vector<1x256xf32> to vector<1x1x256xf32>
      %cst_21 = arith.constant dense<0.000000e+00> : vector<1xf32>
      %37 = vector.multi_reduction <add>, %36, %cst_21 [1, 2] : vector<1x1x256xf32> to vector<1xf32>
      %38 = vector.shape_cast %37 : vector<1xf32> to vector<1x1x1xf32>
      %39 = vector.extract %38[0, 0, 0] : f32 from vector<1x1x1xf32>
      %40 = arith.addf %arg7, %39 : f32
      %c255_i32 = arith.constant 255 : i32
      %41 = tpu.dynamic_rotate %29 by %c255_i32 dim 1 : vector<8x256xf32>, i32 -> vector<8x256xf32>
      %42 = arith.subf %41, %29 : vector<8x256xf32>
      %43 = math.absf %42 : vector<8x256xf32>
      %cst_22 = arith.constant dense<0.000000e+00> : vector<256xf32>
      %44 = vector.multi_reduction <add>, %43, %cst_22 [0] : vector<8x256xf32> to vector<256xf32>
      %45 = vector.shape_cast %44 : vector<256xf32> to vector<1x256xf32>
      %46 = arith.mulf %45, %4 : vector<1x256xf32>
      %47 = vector.shape_cast %46 : vector<1x256xf32> to vector<1x1x256xf32>
      %cst_23 = arith.constant dense<0.000000e+00> : vector<1xf32>
      %48 = vector.multi_reduction <add>, %47, %cst_23 [1, 2] : vector<1x1x256xf32> to vector<1xf32>
      %49 = vector.shape_cast %48 : vector<1xf32> to vector<1x1x1xf32>
      %50 = vector.extract %49[0, 0, 0] : f32 from vector<1x1x1xf32>
      %51 = arith.addf %arg9, %50 : f32
      %c7_i32_24 = arith.constant 7 : i32
      %52 = tpu.dynamic_rotate %29 by %c7_i32_24 dim 0 : vector<8x256xf32>, i32 -> vector<8x256xf32>
      %53 = arith.subf %52, %29 : vector<8x256xf32>
      %54 = math.absf %53 : vector<8x256xf32>
      %cst_25 = arith.constant dense<0.000000e+00> : vector<8xf32>
      %55 = vector.multi_reduction <add>, %54, %cst_25 [1] : vector<8x256xf32> to vector<8xf32>
      %56 = vector.shape_cast %55 : vector<8xf32> to vector<8x1xf32>
      %57 = vector.broadcast %cst : f32 to vector<8x1xf32>
      %58 = arith.select %7, %56, %57 : vector<8x1xi1>, vector<8x1xf32>
      %59 = vector.shape_cast %58 : vector<8x1xf32> to vector<1x8x1xf32>
      %cst_26 = arith.constant dense<0.000000e+00> : vector<1xf32>
      %60 = vector.multi_reduction <add>, %59, %cst_26 [1, 2] : vector<1x8x1xf32> to vector<1xf32>
      %61 = vector.shape_cast %60 : vector<1xf32> to vector<1x1x1xf32>
      %62 = vector.extract %61[0, 0, 0] : f32 from vector<1x1x1xf32>
      %63 = arith.addf %arg8, %62 : f32
      scf.yield %40, %63, %51 : f32, f32, f32
    }
    %c4_i32_8 = arith.constant 4 : i32
    %10 = tpu.iota {dimensions = array<i32: 1>} : vector<1x8x128xi32>
    %c0_i32_9 = arith.constant 0 : i32
    %11 = vector.broadcast %c0_i32_9 : i32 to vector<1x8x128xi32>
    %12 = arith.cmpi eq, %10, %11 : vector<1x8x128xi32>
    %c1_i32_10 = arith.constant 1 : i32
    %13 = vector.broadcast %c1_i32_10 : i32 to vector<1x8x128xi32>
    %14 = arith.cmpi eq, %10, %13 : vector<1x8x128xi32>
    %c2_i32 = arith.constant 2 : i32
    %15 = vector.broadcast %c2_i32 : i32 to vector<1x8x128xi32>
    %16 = arith.cmpi eq, %10, %15 : vector<1x8x128xi32>
    %cst_11 = arith.constant 0.000000e+00 : f32
    %17 = vector.broadcast %9#2 : f32 to vector<1x8x128xf32>
    %18 = vector.broadcast %cst_11 : f32 to vector<1x8x128xf32>
    %19 = arith.select %16, %17, %18 : vector<1x8x128xi1>, vector<1x8x128xf32>
    %20 = vector.broadcast %9#1 : f32 to vector<1x8x128xf32>
    %21 = arith.select %14, %20, %19 : vector<1x8x128xi1>, vector<1x8x128xf32>
    %22 = vector.broadcast %9#0 : f32 to vector<1x8x128xf32>
    %23 = arith.select %12, %22, %21 : vector<1x8x128xi1>, vector<1x8x128xf32>
    %c0_12 = arith.constant 0 : index
    %c0_13 = arith.constant 0 : index
    %c0_14 = arith.constant 0 : index
    %24 = vector.load %arg5[%c0_12, %c0_13, %c0_14] : memref<1x8x128xf32, #tpu.memory_space<vmem>>, vector<1x8x128xf32>
    %25 = arith.addf %24, %23 : vector<1x8x128xf32>
    %c0_15 = arith.constant 0 : index
    %c0_16 = arith.constant 0 : index
    %c0_17 = arith.constant 0 : index
    %26 = vector.load %arg5[%c0_15, %c0_16, %c0_17] : memref<1x8x128xf32, #tpu.memory_space<vmem>>, vector<1x8x128xf32>
    tpu.vector_store %arg5[%c0_15, %c0_16, %c0_17], %25 {strides = array<i32>} : memref<1x8x128xf32, #tpu.memory_space<vmem>>, vector<1x8x128xf32>,
    return
  }
  func.func @transform_0(%arg0: i32, %arg1: i32) -> (i32, i32, i32) {
    %c0_i32 = arith.constant 0 : i32
    %c0_i32_0 = arith.constant 0 : i32
    return %arg0, %arg1, %c0_i32 : i32, i32, i32
  }
  func.func @transform_1(%arg0: i32, %arg1: i32) -> (i32, i32) {
    %c0_i32 = arith.constant 0 : i32
    %c0_i32_0 = arith.constant 0 : i32
    %c0_i32_1 = arith.constant 0 : i32
    return %c0_i32, %c0_i32_0 : i32, i32
  }
  func.func @transform_2(%arg0: i32, %arg1: i32) -> (i32, i32) {
    %c0_i32 = arith.constant 0 : i32
    %c0_i32_0 = arith.constant 0 : i32
    %c0_i32_1 = arith.constant 0 : i32
    return %c0_i32, %c0_i32_0 : i32, i32
  }
  func.func @transform_3(%arg0: i32, %arg1: i32) -> (i32, i32, i32) {
    %c0_i32 = arith.constant 0 : i32
    %c0_i32_0 = arith.constant 0 : i32
    %c0_i32_1 = arith.constant 0 : i32
    return %arg0, %c0_i32, %c0_i32_0 : i32, i32, i32
  }
}

</mosaic_0001>

<llo_original>
// kernel: tpu_custom_call.1
$region0: #{tpu_custom_call.1}
  #allocation0 [shape = 'u32[]', space=smem, size = 0x4, offset = 0x4, fixed_abs, tag = 'smem constant byte address 0x4 - core index']
  #allocation1 [shape = 'u32[144,128]{1,0:T(1,128)}', space=vmem, size = 0x12000, scoped, tag = 'internal scratch']
  %s0 = inlined_call_operand.hbm [shape: f32[8,8,256], index: 0, kind: input, shape index: {}]
  %s1 = inlined_call_operand.hbm [shape: f32[1,256], index: 1, kind: input, shape index: {}]
  %s2 = inlined_call_operand.vmem [shape: f32[1,256], index: 2, kind: input, shape index: {}]
  %s3 = inlined_call_operand.hbm [shape: f32[2,8,128], index: 3, kind: output, shape index: {}]
  %s4 = sld [smem:[#allocation0]]
  $region64: #{tpu_custom_call.1} parent=0
    _
  %s6 = ssub.s32 1, %s4
  %s7 = scalar_select 0, %s6, %s4
  $region1: #{tpu_custom_call.1} parent=0
    #allocation2 [shape = 'u8[65536]{0}', space=vmem, size = 0x10000, scoped, tag = 'input window, operand 0']
    #allocation3 [shape = 's32[2]{0}', space=sflag, size = 0x8, scoped, tag = 'scoped memory for tpu_custom_call.1']
    #allocation4 [shape = 's32[2]{0}', space=sflag, size = 0x8, scoped, tag = 'scoped memory for tpu_custom_call.1']
    #allocation5 [shape = 'u8[1024]{0}', space=vmem, size = 0x400, scoped, tag = 'input window, operand 1, single buffered']
    #allocation6 [shape = 's32[1]{0}', space=sflag, size = 0x4, scoped, tag = 'scoped memory for tpu_custom_call.1']
    #allocation7 [shape = 'u8[8192]{0}', space=vmem, size = 0x2000, scoped, tag = 'output window, operand 0']
    %8 = vsyncpa [#allocation3], 0
    %s9 = scalar_lea.sflag [#allocation3], 1
    %10 = vsyncpa %s9, 0
    %11 = vsyncpa [#allocation6], 0
    %12 = vsyncpa [#allocation4], 0
    %s13 = scalar_lea.sflag [#allocation4], 1
    %14 = vsyncpa %s13, 0
    loop: start=0, step=1, limit=4
    $region2: #{tpu_custom_call.1} parent=1 // loop_pre_header
      _
    $region3: #{tpu_custom_call.1} parent=1 // loop_header
      %s16 = sphi 0, %s20
      %p17 = scmp.ge.s32.totalorder %s16, 4
      %s23 = sphi 0, %s35
      %s24 = sphi 0, %s31
      %s25 = sphi 0, %s23
      %s26 = sphi 0, %s24
      %s27 = sphi 0, %s25
      %s28 = sphi 0, %s26
      %s40 = sphi 0, %s42
      %s43 = sphi 0, %s40
      %s44 = sphi 0, %s43
      %s60 = sphi 0, %s44
      %s64 = sphi 0, %s64
      %s66 = sphi 0, %s64
      %s67 = sphi 0, %s66
      %s81 = sphi 0, %s67
      %s85 = sphi 0, %s85
      %s87 = sphi 0, %s85
      %s88 = sphi 0, %s87
      %s102 = sphi 0, %s88
      %s108 = sphi 0, %s110
      %s111 = sphi 0, %s108
      %s112 = sphi 0, %s111
      %s128 = sphi 0, %s112
    $region4: #{tpu_custom_call.1} parent=1 // loop_header_branch
      %19 = sbr.rel (%p17) target = $region8
    $region5: #{tpu_custom_call.1} parent=1 // loop_body
      %s21 = ssub.s32 %s16, 1
      %s22 = ssub.s32 %s16, 2
      %s29 = sadd.s32 1, %s24
      %p30 = scmp.ge.s32.totalorder %s29, 1
      %s31 = scalar_select %p30, 0, %s29
      %s32 = sadd.s32 1, %s23
      %s33 = scalar_select %p30, %s32, %s23
      %p34 = scmp.ge.s32.totalorder %s33, 2
      %s35 = scalar_select %p34, 0, %s33
      %s36 = ssub.s32 %s23, %s35
      %s37 = ssub.s32 %s24, %s31
      %s38 = sor.u32 %s36, %s37
      %p39 = scmp.eq.s32.totalorder %s38, 0
      %s41 = sadd.s32 %s40, 1
      %s42 = scalar_select %p39, %s40, %s41
      %p45 = pneg %p39
      %p46 = scmp.eq.s32.totalorder %s16, 1
      %p47 = por %p45, %p46
      %p48 = scmp.ne.s32.totalorder %s40, %s43
      %p49 = scmp.eq.s32.totalorder %s16, 0
      %p50 = por %p48, %p49
      %p51 = scmp.ne.s32.totalorder %s40, %s43
      %p52 = scmp.eq.s32.totalorder %s21, 1
      %p53 = por %p51, %p52
      %p54 = scmp.ne.s32.totalorder %s43, %s44
      %p55 = scmp.eq.s32.totalorder %s21, 0
      %p56 = por %p54, %p55
      %p57 = scmp.ne.s32.totalorder %s43, %s44
      %p58 = scmp.eq.s32.totalorder %s22, 1
      %p59 = por %p57, %p58
      %p61 = scmp.ne.s32.totalorder %s44, %s60
      %p62 = scmp.eq.s32.totalorder %s22, 0
      %p63 = por %p61, %p62
      %s65 = sadd.s32 %s64, 1
      %p68 = scmp.eq.s32.totalorder %s16, 1
      %p69 = scmp.ne.s32.totalorder %s64, %s66
      %p70 = scmp.eq.s32.totalorder %s16, 0
      %p71 = por %p69, %p70
      %p72 = scmp.ne.s32.totalorder %s64, %s66
      %p73 = scmp.eq.s32.totalorder %s21, 1
      %p74 = por %p72, %p73
      %p75 = scmp.ne.s32.totalorder %s66, %s67
      %p76 = scmp.eq.s32.totalorder %s21, 0
      %p77 = por %p75, %p76
      %p78 = scmp.ne.s32.totalorder %s66, %s67
      %p79 = scmp.eq.s32.totalorder %s22, 1
      %p80 = por %p78, %p79
      %p82 = scmp.ne.s32.totalorder %s67, %s81
      %p83 = scmp.eq.s32.totalorder %s22, 0
      %p84 = por %p82, %p83
      %s86 = sadd.s32 %s85, 1
      %p89 = scmp.eq.s32.totalorder %s16, 1
      %p90 = scmp.ne.s32.totalorder %s85, %s87
      %p91 = scmp.eq.s32.totalorder %s16, 0
      %p92 = por %p90, %p91
      %p93 = scmp.ne.s32.totalorder %s85, %s87
      %p94 = scmp.eq.s32.totalorder %s21, 1
      %p95 = por %p93, %p94
      %p96 = scmp.ne.s32.totalorder %s87, %s88
      %p97 = scmp.eq.s32.totalorder %s21, 0
      %p98 = por %p96, %p97
      %p99 = scmp.ne.s32.totalorder %s87, %s88
      %p100 = scmp.eq.s32.totalorder %s22, 1
      %p101 = por %p99, %p100
      %p103 = scmp.ne.s32.totalorder %s88, %s102
      %p104 = scmp.eq.s32.totalorder %s22, 0
      %p105 = por %p103, %p104
      %s106 = ssub.s32 %s23, %s35
      %p107 = scmp.eq.s32.totalorder %s106, 0
      %s109 = sadd.s32 %s108, 1
      %s110 = scalar_select %p107, %s108, %s109
      %p113 = pneg %p107
      %p114 = scmp.eq.s32.totalorder %s16, 1
      %p115 = por %p113, %p114
      %p116 = scmp.ne.s32.totalorder %s108, %s111
      %p117 = scmp.eq.s32.totalorder %s16, 0
      %p118 = por %p116, %p117
      %p119 = scmp.ne.s32.totalorder %s108, %s111
      %p120 = scmp.eq.s32.totalorder %s21, 1
      %p121 = por %p119, %p120
      %p122 = scmp.ne.s32.totalorder %s111, %s112
      %p123 = scmp.eq.s32.totalorder %s21, 0
      %p124 = por %p122, %p123
      %p125 = scmp.ne.s32.totalorder %s111, %s112
      %p126 = scmp.eq.s32.totalorder %s22, 1
      %p127 = por %p125, %p126
      %p129 = scmp.ne.s32.totalorder %s112, %s128
      %p130 = scmp.eq.s32.totalorder %s22, 0
      %p131 = por %p129, %p130
      %p132 = scmp.le.s32.totalorder 1, %s16
      %p133 = scmp.lt.s32.totalorder %s16, 3
      %p134 = pnand %p132, %p133
      %p135 = pneg %p134
      // Predicated region
      $region9: #{tpu_custom_call.1} parent=5 // pred_check
        _
      $region10: #{tpu_custom_call.1} parent=5 // pred_check_branch
        %137 = sbr.rel (%p134) target = $region12
      $region11: #{tpu_custom_call.1} parent=5 // pred_region
        %s138 = ssub.s32 %s16, 1
        // Predicated region
        $region13: #{tpu_custom_call.1} parent=11 // pred_check
          %p139 = pneg %p77
        $region14: #{tpu_custom_call.1} parent=11 // pred_check_branch
          %141 = sbr.rel (%p139) target = $region16
        $region15: #{tpu_custom_call.1} parent=11 // pred_region
          %s143 = ssub.s32 32, 32
          %144 = vsyncadd [#allocation6], %s143
          %s146 = sshll.u32 [#allocation5], 4
          %s147 = int_to_ptr.vmem [resolvable:$true] %s146
          %149 = dma.hbm_to_vmem [thread:$0]  %s1, 32, %s147, [#allocation6]
        $region16: #{tpu_custom_call.1} parent=11 // pred_fallthru
          _
        // Predicated region
        $region17: #{tpu_custom_call.1} parent=11 // pred_check
          %p150 = pneg %p98
        $region18: #{tpu_custom_call.1} parent=11 // pred_check_branch
          %152 = sbr.rel (%p150) target = $region20
        $region19: #{tpu_custom_call.1} parent=11 // pred_region
          _
        $region20: #{tpu_custom_call.1} parent=11 // pred_fallthru
          _
      $region12: #{tpu_custom_call.1} parent=5 // pred_fallthru
        _
      %p153 = scmp.lt.s32.totalorder %s16, 2
      // Predicated region
      $region21: #{tpu_custom_call.1} parent=5 // pred_check
        %p154 = pneg %p153
      $region22: #{tpu_custom_call.1} parent=5 // pred_check_branch
        %156 = sbr.rel (%p154) target = $region24
      $region23: #{tpu_custom_call.1} parent=5 // pred_region
        // Predicated region
        $region25: #{tpu_custom_call.1} parent=23 // pred_check
          %p157 = pneg %p50
        $region26: #{tpu_custom_call.1} parent=23 // pred_check_branch
          %159 = sbr.rel (%p157) target = $region28
        $region27: #{tpu_custom_call.1} parent=23 // pred_region
          %s160 = sand.u32 %s40, 1
          %s161 = scalar_lea.sflag [#allocation3], %s160
          %s162 = sand.u32 %s40, 1
          %s163 = smul.addr %s162, 64
          %s164 = scalar_lea.vmem [#allocation2], %s163
          %s165 = smul.u32 4, %s23
          %s167 = ssub.s32 1024, 1024
          %168 = vsyncadd %s161, %s167
          %s169 = smul.addr %s24, 2
          %s170 = smul.addr %s165, 2
          %s171 = sadd.s32 %s169, %s170
          %s172 = smul.addr %s171, 128
          %s173 = scalar_lea.hbm %s0, %s172
          %s174 = sshll.u32 %s164, 4
          %s175 = int_to_ptr.vmem [resolvable:$true] %s174
          %180 = dma.hbm_to_vmem [thread:$0]  %s173, 1024, %s175, %s161, 256, 256, 16
        $region28: #{tpu_custom_call.1} parent=23 // pred_fallthru
          _
      $region24: #{tpu_custom_call.1} parent=5 // pred_fallthru
        _
      %p181 = scmp.le.s32.totalorder 1, %s16
      %p182 = scmp.lt.s32.totalorder %s16, 3
      %p183 = pnand %p181, %p182
      %p184 = pneg %p183
      // Predicated region
      $region29: #{tpu_custom_call.1} parent=5 // pred_check
        _
      $region30: #{tpu_custom_call.1} parent=5 // pred_check_branch
        %186 = sbr.rel (%p183) target = $region32
      $region31: #{tpu_custom_call.1} parent=5 // pred_region
        %s187 = ssub.s32 %s16, 1
        %s188 = sand.u32 %s43, 1
        %s189 = scalar_lea.sflag [#allocation3], %s188
        %s190 = sand.u32 %s43, 1
        %s191 = smul.addr %s190, 64
        %s192 = scalar_lea.vmem [#allocation2], %s191
        // Predicated region
        $region33: #{tpu_custom_call.1} parent=31 // pred_check
          %p193 = pneg %p56
        $region34: #{tpu_custom_call.1} parent=31 // pred_check_branch
          %195 = sbr.rel (%p193) target = $region36
        $region35: #{tpu_custom_call.1} parent=31 // pred_region
          %196 = dma.done %s189, 1024
        $region36: #{tpu_custom_call.1} parent=31 // pred_fallthru
          _
        // Predicated region
        $region37: #{tpu_custom_call.1} parent=31 // pred_check
          %p197 = pneg %p77
        $region38: #{tpu_custom_call.1} parent=31 // pred_check_branch
          %199 = sbr.rel (%p197) target = $region40
        $region39: #{tpu_custom_call.1} parent=31 // pred_region
          %200 = dma.done [#allocation6], 32
        $region40: #{tpu_custom_call.1} parent=31 // pred_fallthru
          _
        %s201 = sand.u32 %s43, 1
        %s202 = scalar_lea.sflag [#allocation3], %s201
        %s203 = sand.u32 %s43, 1
        %s204 = smul.addr %s203, 64
        %s205 = scalar_lea.vmem [#allocation2], %s204
        %p206 = pneg %p56
        %p207 = pneg %p53
        %p208 = pneg %p77
        %p209 = pneg %p74
        %p210 = pneg %p98
        %p211 = pneg %p95
        %p212 = pneg %p124
        %p213 = pneg %p121
        %s214 = sand.u32 %s111, 1
        %s215 = scalar_lea.sflag [#allocation4], %s214
        %s216 = sand.u32 %s111, 1
        %s217 = smul.addr %s216, 8
        %s218 = scalar_lea.vmem [#allocation7], %s217
        %s219 = smul.u32 4, %s25
        %p220 = scmp.eq.s32.totalorder %s26, 0
        // Predicated region
        $region41: #{tpu_custom_call.1} parent=31 // pred_check
          %p221 = pneg %p220
        $region42: #{tpu_custom_call.1} parent=31 // pred_check_branch
          %223 = sbr.rel (%p221) target = $region44
        $region43: #{tpu_custom_call.1} parent=31 // pred_region
          %224 = vst [vmem:[%s218] sm:$0xff] 0.0
        $region44: #{tpu_custom_call.1} parent=31 // pred_fallthru
          _
        %v225 = vld [vmem:[#allocation5] sm:$0x3]
        %v226 = vld [vmem:[%s2] sm:$0x3]
        %v227 = vlaneseq
        %v228 = vshrl.u32 %v227, 7
        %vm229 = vcmp.lt.s32.totalorder %v228, 7
        loop: start=0, step=1, limit=4
        $region45: #{tpu_custom_call.1} parent=31 // loop_pre_header
          _
        $region46: #{tpu_custom_call.1} parent=31 // loop_header
          %s231 = sphi 0, %s235
          %p232 = scmp.ge.s32.totalorder %s231, 4
          %s236 = sphi 0.0, %s295
          %s237 = sphi 0.0, %s366
          %s238 = sphi 0.0, %s344
        $region47: #{tpu_custom_call.1} parent=31 // loop_header_branch
          %234 = sbr.rel (%p232) target = $region51
        $region48: #{tpu_custom_call.1} parent=31 // loop_body
          %s239 = smul.u32 %s231, 2
          %s240 = smul.addr %s239, 8
          %s241 = scalar_lea.vmem %s192, %s240 [#allocation2]
          %v242 = vld [vmem:[%s241] sm:$0xff]
          %v243 = vld [vmem:[%s241 + $0x8] sm:$0xff]
          %244 = vrot.lane.b32.xlu0 %v242, 112
          %v245 = vpop.permute.xlu0 %244
          %246 = vrot.lane.b32.xlu0 %v243, 112
          %v247 = vpop.permute.xlu0 %246
          %v248 = vlaneseq
          %v249 = vand.u32 %v248, 127
          %vm250 = vcmp.lt.s32.totalorder %v249, 112
          %v251 = vsel %vm250, %v245, %v247
          %v252 = vsel %vm250, %v247, %v245
          %v253 = vsub.f32 %v251, %v242
          %v254 = vsub.f32 %v252, %v243
          %v255 = vand.u32 2147483647, %v253
          %v256 = vand.u32 2147483647, %v254
          %v257 = vrot.slane %v255, 4
          %v258 = vadd.f32 %v255, %v257
          %v259 = vrot.slane %v258, 2
          %v260 = vadd.f32 %v258, %v259
          %v261 = vrot.slane %v260, 1
          %v262 = vadd.f32 %v260, %v261
          %v263 = vrot.slane %v256, 4
          %v264 = vadd.f32 %v256, %v263
          %v265 = vrot.slane %v264, 2
          %v266 = vadd.f32 %v264, %v265
          %v267 = vrot.slane %v266, 1
          %v268 = vadd.f32 %v266, %v267
          %v270 = vlaneseq
          %v271 = vshrl.u32 %v270, 7
          %v272 = vsub.s32 0, %v271
          %v273 = vrot.slane %v225, %v272
          %v274 = vlaneseq
          %v275 = vshrl.u32 %v274, 7
          %v276 = vsub.s32 1, %v275
          %v277 = vrot.slane %v225, %v276
          %v280 = vmul.f32 %v262, %v273
          %v281 = vmul.f32 %v268, %v277
          %vm282 = vcmask 1040384
          %v283 = vsel %vm282, %v280, 0.0
          %v284 = vsel %vm282, %v281, 0.0
          %v285 = vadd.f32 %v283, %v284
          %286 = vadd.xlane.f32.xlu0 %v285
          %v287 = vpop.xlane.xlu0 %286
          %v288 = vrot.slane %v287, 4
          %v289 = vadd.f32 %v287, %v288
          %v290 = vrot.slane %v289, 2
          %v291 = vadd.f32 %v289, %v290
          %v292 = vrot.slane %v291, 1
          %v293 = vadd.f32 %v291, %v292
          %s294 = vtos %v293
          %s295 = sadd.f32 %s236, %s294
          %296 = vrot.lane.b32.xlu0 %v242, 127
          %v297 = vpop.permute.xlu0 %296
          %298 = vrot.lane.b32.xlu0 %v243, 127
          %v299 = vpop.permute.xlu0 %298
          %vm300 = vcmp.lt.s32.totalorder %v249, 127
          %v301 = vsel %vm300, %v297, %v299
          %v302 = vsel %vm300, %v299, %v297
          %v303 = vsub.f32 %v301, %v242
          %v304 = vsub.f32 %v302, %v243
          %v305 = vand.u32 2147483647, %v303
          %v306 = vand.u32 2147483647, %v304
          %v307 = vrot.slane %v305, 4
          %v308 = vadd.f32 %v305, %v307
          %v309 = vrot.slane %v308, 2
          %v310 = vadd.f32 %v308, %v309
          %v311 = vrot.slane %v310, 1
          %v312 = vadd.f32 %v310, %v311
          %v313 = vrot.slane %v306, 4
          %v314 = vadd.f32 %v306, %v313
          %v315 = vrot.slane %v314, 2
          %v316 = vadd.f32 %v314, %v315
          %v317 = vrot.slane %v316, 1
          %v318 = vadd.f32 %v316, %v317
          %v320 = vlaneseq
          %v321 = vshrl.u32 %v320, 7
          %v322 = vsub.s32 0, %v321
          %v323 = vrot.slane %v226, %v322
          %v324 = vlaneseq
          %v325 = vshrl.u32 %v324, 7
          %v326 = vsub.s32 1, %v325
          %v327 = vrot.slane %v226, %v326
          %v330 = vmul.f32 %v312, %v323
          %v331 = vmul.f32 %v318, %v327
          %v332 = vsel %vm282, %v330, 0.0
          %v333 = vsel %vm282, %v331, 0.0
          %v334 = vadd.f32 %v332, %v333
          %335 = vadd.xlane.f32.xlu0 %v334
          %v336 = vpop.xlane.xlu0 %335
          %v337 = vrot.slane %v336, 4
          %v338 = vadd.f32 %v336, %v337
          %v339 = vrot.slane %v338, 2
          %v340 = vadd.f32 %v338, %v339
          %v341 = vrot.slane %v340, 1
          %v342 = vadd.f32 %v340, %v341
          %s343 = vtos %v342
          %s344 = sadd.f32 %s238, %s343
          %v345 = vrot.slane %v242, 1
          %v346 = vrot.slane %v243, 1
          %v347 = vsub.f32 %v345, %v242
          %v348 = vsub.f32 %v346, %v243
          %v349 = vand.u32 2147483647, %v347
          %v350 = vand.u32 2147483647, %v348
          %v351 = vadd.f32 %v349, %v350
          %352 = vadd.xlane.f32.xlu0 %v351
          %v353 = vpop.xlane.xlu0 %352
          %v354 = vsel %vm229, %v353, 0.0
          %vm355 = vcmask 7168
          %v356 = vsel %vm355, %v354, 0.0
          %357 = vadd.xlane.f32.xlu0 %v356
          %v358 = vpop.xlane.xlu0 %357
          %v359 = vrot.slane %v358, 4
          %v360 = vadd.f32 %v358, %v359
          %v361 = vrot.slane %v360, 2
          %v362 = vadd.f32 %v360, %v361
          %v363 = vrot.slane %v362, 1
          %v364 = vadd.f32 %v362, %v363
          %s365 = vtos %v364
          %s366 = sadd.f32 %s237, %s365
        $region49: #{tpu_custom_call.1} parent=31 // loop_footer
          %s235 = sadd.s32 1, %s231
        $region50: #{tpu_custom_call.1} parent=31 // loop_footer_branch
          %230 = sbr.rel target = $region46
        $region51: #{tpu_custom_call.1} parent=31 // loop_exit
          _
        %vm367 = vcmp.eq.s32.totalorder %v228, 0
        %vm368 = vcmp.eq.s32.totalorder %v228, 1
        %vm369 = vcmp.eq.s32.totalorder %v228, 2
        %v370 = vstv %s238
        %v371 = vsel %vm369, %v370, 0.0
        %v372 = vstv %s237
        %v373 = vsel %vm368, %v372, %v371
        %v374 = vstv %s236
        %v375 = vsel %vm367, %v374, %v373
        %v376 = vld [vmem:[%s218] sm:$0xff]
        %v377 = vadd.f32 %v376, %v375
        %378 = vst [vmem:[%s218] sm:$0xff] %v377
        %s379 = sand.u32 %s111, 1
        %s380 = scalar_lea.sflag [#allocation4], %s379
        %s381 = sand.u32 %s111, 1
        %s382 = smul.addr %s381, 8
        %s383 = scalar_lea.vmem [#allocation7], %s382
        // Predicated region
        $region52: #{tpu_custom_call.1} parent=31 // pred_check
          %p384 = pneg %p121
        $region53: #{tpu_custom_call.1} parent=31 // pred_check_branch
          %386 = sbr.rel (%p384) target = $region55
        $region54: #{tpu_custom_call.1} parent=31 // pred_region
          %s388 = ssub.s32 128, 128
          %389 = vsyncadd %s380, %s388
          %s390 = smul.addr %s25, 128
          %s391 = scalar_lea.hbm %s3, %s390
          %s393 = sshll.u32 %s383, 4
          %s394 = int_to_ptr.vmem [resolvable:$true] %s393
          %396 = dma.vmem_to_hbm [thread:$0]  %s394, 128, %s391, %s380
        $region55: #{tpu_custom_call.1} parent=31 // pred_fallthru
          _
      $region32: #{tpu_custom_call.1} parent=5 // pred_fallthru
        _
      %p397 = scmp.le.s32.totalorder 2, %s16
      // Predicated region
      $region56: #{tpu_custom_call.1} parent=5 // pred_check
        %p398 = pneg %p397
      $region57: #{tpu_custom_call.1} parent=5 // pred_check_branch
        %400 = sbr.rel (%p398) target = $region59
      $region58: #{tpu_custom_call.1} parent=5 // pred_region
        %s401 = ssub.s32 %s16, 2
        // Predicated region
        $region60: #{tpu_custom_call.1} parent=58 // pred_check
          %p402 = pneg %p127
        $region61: #{tpu_custom_call.1} parent=58 // pred_check_branch
          %404 = sbr.rel (%p402) target = $region63
        $region62: #{tpu_custom_call.1} parent=58 // pred_region
          %s405 = sand.u32 %s112, 1
          %s406 = scalar_lea.sflag [#allocation4], %s405
          %s407 = sand.u32 %s112, 1
          %s408 = smul.addr %s407, 8
          %s409 = scalar_lea.vmem [#allocation7], %s408
          %410 = dma.done %s406, 128
        $region63: #{tpu_custom_call.1} parent=58 // pred_fallthru
          _
      $region59: #{tpu_custom_call.1} parent=5 // pred_fallthru
        _
    $region6: #{tpu_custom_call.1} parent=1 // loop_footer
      %s20 = sadd.s32 1, %s16
    $region7: #{tpu_custom_call.1} parent=1 // loop_footer_branch
      %15 = sbr.rel target = $region3
    $region8: #{tpu_custom_call.1} parent=1 // loop_exit
      _
    %411 = vsyncpa [#allocation3], 1
    %s412 = scalar_lea.sflag [#allocation3], 1
    %413 = vsyncpa %s412, 1
    %414 = vsyncpa [#allocation6], 1
    %415 = vsyncpa [#allocation4], 1
    %s416 = scalar_lea.sflag [#allocation4], 1
    %417 = vsyncpa %s416, 1

</llo_original>
